<compile_context>
chip_gen: v6e
topology: v6e:2x2x1
jax: 0.10.0
libtpu: 0.0.40
codegen_flags: <defaults>
</compile_context>

<pallas_src>
import jax
import jax.numpy as jnp
from jax import lax
from jax.experimental import pallas as pl
from jax.experimental.pallas import tpu as pltpu

KL_BETA = 1.0
TRIPLET_BETA = 1.0

TARGET_TILE_ELEMS = 1 << 20           # ~(2048, 512): 4 MiB f32 / 2 MiB bf16 per input tile
VMEM_LIMIT_BYTES = 32 * 1024 * 1024   # 2 inputs x 2 buffers x 4 MiB + 4 MiB acc ≈ 20 MiB


def _round_up(x, m):
  return ((x + m - 1) // m) * m


def _cdiv(a, b):
  return -(-a // b)


def _device_kind():
  try:
    return jax.devices()[0].device_kind.lower()
  except Exception:  # pragma: no cover - CPU / interpret fallback
    return ""


def _natural_2d_view(x):
  """2D (rows, cols) view of `x`, chosen so the reshape avoids an HBM relayout.

  Collapsing leading dims is layout-free; touching the minor dims generally is
  not.  Preference order:
    1. keep the last dim when it is already lane-aligned (multiple of 128),
    2. else merge the trailing (H, W) plane when that is lane-aligned,
    3. else keep the natural last dim (lane-padded loads, but no extra HBM
       pass over the tensor, which is what dominates a mem-bound kernel).
  """
  shape = x.shape
  if x.ndim == 0:
    return x.reshape(1, 1)
  if x.ndim == 1:
    return x.reshape(1, shape[0])
  if x.ndim == 2:
    return x
  if shape[-1] % 128 == 0:
    return x.reshape(-1, shape[-1])
  plane = shape[-2] * shape[-1]
  if plane % 128 == 0:
    return x.reshape(-1, plane)
  # TODO(synk): for very narrow minor dims (<8 lanes) a one-off relayout to a
  # lane-dense slab could still win for huge images; not needed here.
  return x.reshape(-1, shape[-1])


def uncertainty_triplet_loss(real_data, fake_data, mean, logvar, triplet_data,
                             kl_beta=KL_BETA, triplet_beta=TRIPLET_BETA,
                             num_core_splits=None, split_semantics=None,
                             target_tile_elems=None):
  """JAX/Pallas forward matching UncertaintyTripletLoss.forward.

  Returns (final_loss, triplet_error, recon_error, kl_divergence_error).
  jit-compatible.  Images are read in their stored dtype (f32 or bf16 if the
  producer already emits bf16 — no standalone cast here) and upcast to f32
  inside the kernel.
  """
  if real_data.shape != fake_data.shape:
    raise ValueError("real_data and fake_data must have the same shape")

  n_elems = int(real_data.size)
  real2d = _natural_2d_view(real_data)
  fake2d = _natural_2d_view(fake_data)
  rows, cols = int(real2d.shape[0]), int(real2d.shape[1])

  # ---- tiling ---------------------------------------------------------------
  target = TARGET_TILE_ELEMS if target_tile_elems is None else int(target_tile_elems)
  tile_rows = _round_up(max(1, target // max(cols, 1)), 8)
  tile_rows = min(tile_rows, _round_up(rows, 8))
  if tile_rows >= rows:
    tile_rows = rows                       # single full-extent row block
  total_tiles = _cdiv(rows, tile_rows)

  kind = _device_kind()
  if num_core_splits is None:
    num_splits = 2 if "v7" in kind else 1  # v7x: 2 TensorCores per chip
  else:
    num_splits = int(num_core_splits)
  num_splits = max(1, min(num_splits, total_tiles))
  tiles_per_split = _cdiv(total_tiles, num_splits)

  if split_semantics is not None:
    split_sem = split_semantics
  elif num_splits <= 1:
    split_sem = pltpu.ARBITRARY
  elif "v7" in kind:
    # Only CORE_PARALLEL reliably shards a grid axis across the two
    # TensorCores; plain "parallel" often leaves codegen unchanged.
    split_sem = getattr(pltpu, "CORE_PARALLEL", pltpu.PARALLEL)
  else:
    split_sem = pltpu.PARALLEL

  # Tiles past the end of the array (ragged tail and/or the padding tile an
  # uneven core split creates) are index-clamped (safe DMA) and fully masked
  # in-kernel, so they contribute exactly zero.
  has_oob_tiles = num_splits * tiles_per_split > total_tiles
  ragged = has_oob_tiles or (total_tiles * tile_rows != rows)

  if has_oob_tiles:
    def img_index_map(c, i):
      return (jnp.minimum(c * tiles_per_split + i, total_tiles - 1), 0)
  else:
    def img_index_map(c, i):
      return (c * tiles_per_split + i, 0)

  img_spec = pl.BlockSpec((tile_rows, cols), img_index_map)

  # ---- kernel: per-split BCE partial sums -----------------------------------
  def bce_partial_kernel(real_ref, fake_ref, part_ref, acc_ref):
    c = pl.program_id(0)
    i = pl.program_id(1)

    @pl.when(i == 0)
    def _init():
      acc_ref[...] = jnp.zeros_like(acc_ref)

    real = real_ref[...].astype(jnp.float32)
    fake = fake_ref[...].astype(jnp.float32)
    # F.binary_cross_entropy clamps each log term at -100; the clamp must
    # precede the multiply so real in {0, 1} end points stay finite.
    log_f = jnp.maximum(jnp.log(fake), -100.0)
    log_1mf = jnp.maximum(jnp.log(1.0 - fake), -100.0)
    ll = real * log_f + (1.0 - real) * log_1mf            # (tile_rows, cols)

    if ragged:
      tile_idx = c * tiles_per_split + i                  # logical (unclamped)
      valid_rows = rows - tile_idx * tile_rows

      @pl.when(valid_rows >= tile_rows)
      def _interior_tile():
        acc_ref[...] += ll

      @pl.when(valid_rows < tile_rows)
      def _tail_tile():
        # Select (NOT multiply): rows past the end may hold NaN/Inf after the
        # logs and must never reach the accumulator.
        row_ids = lax.broadcasted_iota(jnp.int32, (tile_rows, cols), 0)
        acc_ref[...] += jnp.where(row_ids < valid_rows, ll, 0.0)
    else:
      acc_ref[...] += ll

    @pl.when(i == tiles_per_split - 1)
    def _finalize_split():
      # One cross-lane reduce + one SMEM store per split (not per tile).
      part_ref[0, 0] = -jnp.sum(acc_ref[...])

  bytes_per_elem = real2d.dtype.itemsize
  cost = pl.CostEstimate(
      flops=7 * n_elems,
      transcendentals=2 * n_elems,
      bytes_accessed=2 * rows * cols * bytes_per_elem + 4 * num_splits)

  partials = pl.pallas_call(
      bce_partial_kernel,
      out_shape=jax.ShapeDtypeStruct((num_splits, 1), jnp.float32),
      grid_spec=pltpu.PrefetchScalarGridSpec(
          num_scalar_prefetch=0,
          grid=(num_splits, tiles_per_split),
          in_specs=[img_spec, img_spec],
          out_specs=pl.BlockSpec((1, 1), lambda c, i: (c, 0),
                                 memory_space=pltpu.MemorySpace.SMEM),
          scratch_shapes=[pltpu.VMEM((tile_rows, cols), jnp.float32)]),
      compiler_params=pltpu.CompilerParams(
          dimension_semantics=(split_sem, pltpu.ARBITRARY),
          vmem_limit_bytes=VMEM_LIMIT_BYTES),
      cost_estimate=cost,
  )(real2d, fake2d)

  # ---- finalize (tiny; plain JAX per the perf review) ------------------------
  recon = jnp.sum(partials) / jnp.float32(n_elems)        # TRUE element count

  mean32 = mean.astype(jnp.float32)
  logvar32 = logvar.astype(jnp.float32)
  kl = -0.5 * jnp.mean(1.0 + logvar32 - jnp.square(mean32) - jnp.exp(logvar32))

  if triplet_beta != 0.0:
    (am, alv), (pm, plv), (nm, nlv) = jax.tree_util.tree_map(
        lambda t: t.astype(jnp.float32), triplet_data)
    var_a = jnp.exp(alv)                 # shared by both Jensen-Shannon terms

    def neg_js(mean_b, logvar_b):
      var_b = jnp.exp(logvar_b)
      mean_m = 0.5 * (am + mean_b)
      var_m = 0.25 * (var_a + var_b)
      log_var_m = jnp.log(var_m)
      inv_var_m = 1.0 / var_m
      kl_a = (var_a * inv_var_m + jnp.square(mean_m - am) * inv_var_m
              - 1.0 + log_var_m - alv)
      kl_b = (var_b * inv_var_m + jnp.square(mean_m - mean_b) * inv_var_m
              - 1.0 + log_var_m - logvar_b)
      return -0.25 * jnp.sum(kl_a + kl_b, axis=-1)        # (B,)

    d_ap = neg_js(pm, plv)
    d_an = neg_js(nm, nlv)
    # softmax([d_ap, d_an], axis=1)[:, 0]  ==  sigmoid(d_ap - d_an)
    prob = jax.nn.sigmoid(d_ap - d_an)
    triplet = -jnp.mean(prob)
  else:
    triplet = jnp.float32(0.0)

  final = recon + kl_beta * kl + triplet_beta * triplet
  return final, triplet, recon, kl


def _reference(real_data, fake_data, mean, logvar, triplet_data,
               kl_beta=KL_BETA, triplet_beta=TRIPLET_BETA):
  """Plain-JAX reference mirroring the PyTorch module (f32)."""
  (am, alv), (pm, plv), (nm, nlv) = triplet_data
  real = real_data.reshape(-1).astype(jnp.float32)
  fake = fake_data.reshape(-1).astype(jnp.float32)
  bce = -(real * jnp.maximum(jnp.log(fake), -100.0)
          + (1.0 - real) * jnp.maximum(jnp.log(1.0 - fake), -100.0))
  recon = jnp.mean(bce)
  kl = -0.5 * jnp.mean(1.0 + logvar - mean ** 2 - jnp.exp(logvar))

  def neg_js(ma, lva, mb, lvb):
    va, vb = jnp.exp(lva), jnp.exp(lvb)
    mm = 0.5 * (ma + mb)
    vm = 0.25 * (va + vb)
    kla = 0.5 * jnp.sum(va / vm + (mm - ma) ** 2 / vm - 1.0
                        + jnp.log(vm) - lva, axis=-1, keepdims=True)
    klb = 0.5 * jnp.sum(vb / vm + (mm - mb) ** 2 / vm - 1.0
                        + jnp.log(vm) - lvb, axis=-1, keepdims=True)
    return -0.5 * (kla + klb)

  d_ap = neg_js(am, alv, pm, plv)
  d_an = neg_js(am, alv, nm, nlv)
  prob = jax.nn.softmax(jnp.concatenate([d_ap, d_an], axis=1), axis=1)[:, 0]
  triplet = -jnp.mean(prob)
  if triplet_beta == 0.0:
    triplet = jnp.float32(0.0)
  final = recon + kl_beta * kl + triplet_beta * triplet
  return final, triplet, recon, kl


if __name__ == "__main__":
  key = jax.random.PRNGKey(0)
  keys = jax.random.split(key, 12)

  B, C, H, W = 2, 4, 16, 16
  LATENT_DIM = 2

  real_data = jax.random.uniform(keys[0], (B, C, H, W), dtype=jnp.float32)
  fake_data = jax.nn.sigmoid(
      jax.random.normal(keys[1], (B, C, H, W), dtype=jnp.float32))
  mean = jax.random.normal(keys[2], (B, LATENT_DIM), dtype=jnp.float32)
  logvar = 0.1 * jax.random.normal(keys[3], (B, LATENT_DIM), dtype=jnp.float32)
  anchor = (jax.random.normal(keys[4], (B, LATENT_DIM), dtype=jnp.float32),
            0.2 * jax.random.normal(keys[5], (B, LATENT_DIM), dtype=jnp.float32))
  positive = (jax.random.normal(keys[6], (B, LATENT_DIM), dtype=jnp.float32),
              0.2 * jax.random.normal(keys[7], (B, LATENT_DIM), dtype=jnp.float32))
  negative = (jax.random.normal(keys[8], (B, LATENT_DIM), dtype=jnp.float32),
              0.2 * jax.random.normal(keys[9], (B, LATENT_DIM), dtype=jnp.float32))
  triplet_data = (anchor, positive, negative)

  # 1) default config (auto core split / tile size), under jit.
  ref = _reference(real_data, fake_data, mean, logvar, triplet_data)
  got = jax.jit(uncertainty_triplet_loss)(real_data, fake_data, mean, logvar,
                                          triplet_data)
  got = jax.block_until_ready(got)
  for g, w in zip(got, ref):
    assert jnp.allclose(g, w, rtol=1e-5, atol=1e-5), (g, w)

  # 2) ragged tail + forced 2-way split: exercises the in-kernel tail masking
  #    and the clamped index map (small tiles forced via target_tile_elems).
  real_r = jax.random.uniform(keys[10], (9, 4, 256), dtype=jnp.float32)
  fake_r = jax.nn.sigmoid(
      jax.random.normal(keys[11], (9, 4, 256), dtype=jnp.float32))
  ref_r = _reference(real_r, fake_r, mean, logvar, triplet_data)
  got_r = uncertainty_triplet_loss(real_r, fake_r, mean, logvar, triplet_data,
                                   num_core_splits=2,
                                   split_semantics=pltpu.PARALLEL,
                                   target_tile_elems=2048)
  got_r = jax.block_until_ready(got_r)
  for g, w in zip(got_r, ref_r):
    assert jnp.allclose(g, w, rtol=1e-4, atol=1e-5), (g, w)

  print("KERNEL_OK")
</pallas_src>

<mosaic_0001>
module attributes {stable_mosaic.version = 11 : i64} {
  func.func @bce_partial_kernel(%arg0: i32, %arg1: i32, %arg2: memref<8x256xf32, #tpu.memory_space<vmem>>, %arg3: memref<8x256xf32, #tpu.memory_space<vmem>>, %arg4: memref<1x1xf32, #tpu.memory_space<smem>>, %arg5: memref<8x256xf32, #tpu.memory_space<vmem>>) attributes {dimension_semantics = [#tpu.dimension_semantics<arbitrary>, #tpu.dimension_semantics<arbitrary>], iteration_bounds = array<i64: 1, 1>, scalar_prefetch = 0 : i64, scratch_operands = 1 : i64, tpu.core_type = #tpu.core_type<tc>, window_params = [{transform_indices = @transform_0, window_bounds = array<i64: 8, 256>}, {transform_indices = @transform_1, window_bounds = array<i64: 8, 256>}, {transform_indices = @transform_2, window_bounds = array<i64: 1, 1>}]} {
    %c0_i32 = arith.constant 0 : i32
    %0 = arith.cmpi eq, %arg1, %c0_i32 : i32
    %1 = arith.extui %0 : i1 to i32
    %c0_i32_0 = arith.constant 0 : i32
    %2 = arith.cmpi ne, %1, %c0_i32_0 : i32
    scf.if %2 {
      %cst_13 = arith.constant 0.000000e+00 : f32
      %24 = vector.broadcast %cst_13 : f32 to vector<8x256xf32>
      %c0_14 = arith.constant 0 : index
      %c0_15 = arith.constant 0 : index
      %25 = vector.load %arg5[%c0_14, %c0_15] : memref<8x256xf32, #tpu.memory_space<vmem>>, vector<8x256xf32>
      tpu.vector_store %arg5[%c0_14, %c0_15], %24 {strides = array<i32>} : memref<8x256xf32, #tpu.memory_space<vmem>>, vector<8x256xf32>,
    } else {
    }
    %c0 = arith.constant 0 : index
    %c0_1 = arith.constant 0 : index
    %3 = vector.load %arg2[%c0, %c0_1] : memref<8x256xf32, #tpu.memory_space<vmem>>, vector<8x256xf32>
    %c0_2 = arith.constant 0 : index
    %c0_3 = arith.constant 0 : index
    %4 = vector.load %arg3[%c0_2, %c0_3] : memref<8x256xf32, #tpu.memory_space<vmem>>, vector<8x256xf32>
    %5 = math.log %4 : vector<8x256xf32>
    %cst = arith.constant -1.000000e+02 : f32
    %6 = vector.broadcast %cst : f32 to vector<8x256xf32>
    %7 = arith.maximumf %5, %6 : vector<8x256xf32>
    %cst_4 = arith.constant 1.000000e+00 : f32
    %8 = vector.broadcast %cst_4 : f32 to vector<8x256xf32>
    %9 = arith.subf %8, %4 : vector<8x256xf32>
    %10 = math.log %9 : vector<8x256xf32>
    %cst_5 = arith.constant -1.000000e+02 : f32
    %11 = vector.broadcast %cst_5 : f32 to vector<8x256xf32>
    %12 = arith.maximumf %10, %11 : vector<8x256xf32>
    %13 = arith.mulf %3, %7 : vector<8x256xf32>
    %cst_6 = arith.constant 1.000000e+00 : f32
    %14 = vector.broadcast %cst_6 : f32 to vector<8x256xf32>
    %15 = arith.subf %14, %3 : vector<8x256xf32>
    %16 = arith.mulf %15, %12 : vector<8x256xf32>
    %17 = arith.addf %13, %16 : vector<8x256xf32>
    %c0_7 = arith.constant 0 : index
    %c0_8 = arith.constant 0 : index
    %18 = vector.load %arg5[%c0_7, %c0_8] : memref<8x256xf32, #tpu.memory_space<vmem>>, vector<8x256xf32>
    %19 = arith.addf %18, %17 : vector<8x256xf32>
    %c0_9 = arith.constant 0 : index
    %c0_10 = arith.constant 0 : index
    %20 = vector.load %arg5[%c0_9, %c0_10] : memref<8x256xf32, #tpu.memory_space<vmem>>, vector<8x256xf32>
    tpu.vector_store %arg5[%c0_9, %c0_10], %19 {strides = array<i32>} : memref<8x256xf32, #tpu.memory_space<vmem>>, vector<8x256xf32>,
    %c0_i32_11 = arith.constant 0 : i32
    %21 = arith.cmpi eq, %arg1, %c0_i32_11 : i32
    %22 = arith.extui %21 : i1 to i32
    %c0_i32_12 = arith.constant 0 : i32
    %23 = arith.cmpi ne, %22, %c0_i32_12 : i32
    scf.if %23 {
      %c0_13 = arith.constant 0 : index
      %c0_14 = arith.constant 0 : index
      %24 = vector.load %arg5[%c0_13, %c0_14] : memref<8x256xf32, #tpu.memory_space<vmem>>, vector<8x256xf32>
      %25 = vector.shape_cast %24 : vector<8x256xf32> to vector<1x8x256xf32>
      %cst_15 = arith.constant dense<0.000000e+00> : vector<1xf32>
      %26 = vector.multi_reduction <add>, %25, %cst_15 [1, 2] : vector<1x8x256xf32> to vector<1xf32>
      %27 = vector.shape_cast %26 : vector<1xf32> to vector<1x1x1xf32>
      %28 = vector.extract %27[0, 0, 0] : f32 from vector<1x1x1xf32>
      %cst_16 = arith.constant 0.000000e+00 : f32
      %29 = arith.subf %cst_16, %28 : f32
      %c0_17 = arith.constant 0 : index
      %c0_18 = arith.constant 0 : index
      %30 = memref.load %arg4[%c0_17, %c0_18] : memref<1x1xf32, #tpu.memory_space<smem>>
      memref.store %29, %arg4[%c0_17, %c0_18] : memref<1x1xf32, #tpu.memory_space<smem>>
    } else {
    }
    return
  }
  func.func @transform_0(%arg0: i32, %arg1: i32) -> (i32, i32) {
    %c1_i32 = arith.constant 1 : i32
    %0 = arith.muli %arg0, %c1_i32 : i32
    %1 = arith.addi %0, %arg1 : i32
    %c0_i32 = arith.constant 0 : i32
    %c0_i32_0 = arith.constant 0 : i32
    return %1, %c0_i32 : i32, i32
  }
  func.func @transform_1(%arg0: i32, %arg1: i32) -> (i32, i32) {
    %c1_i32 = arith.constant 1 : i32
    %0 = arith.muli %arg0, %c1_i32 : i32
    %1 = arith.addi %0, %arg1 : i32
    %c0_i32 = arith.constant 0 : i32
    %c0_i32_0 = arith.constant 0 : i32
    return %1, %c0_i32 : i32, i32
  }
  func.func @transform_2(%arg0: i32, %arg1: i32) -> (i32, i32) {
    %c0_i32 = arith.constant 0 : i32
    %c0_i32_0 = arith.constant 0 : i32
    return %arg0, %c0_i32 : i32, i32
  }
}

</mosaic_0001>

<llo_original>
// kernel: uncertainty_triplet_loss.1
$region0: #{uncertainty_triplet_loss.1}
  #allocation0 [shape = 'u32[]', space=smem, size = 0x4, offset = 0x4, fixed_abs, tag = 'smem constant byte address 0x4 - core index']
  #allocation1 [shape = 'u32[144,128]{1,0:T(1,128)}', space=vmem, size = 0x12000, scoped, tag = 'internal scratch']
  #allocation2 [shape = 'f32[8,256]{1,0:T(8,128)}', space=vmem, size = 0x2000, scoped, tag = 'scratch operand']
  %s0 = inlined_call_operand.vmem [shape: f32[8,256], index: 0, kind: input, shape index: {}]
  %s1 = inlined_call_operand.vmem [shape: f32[8,256], index: 1, kind: input, shape index: {}]
  %s2 = inlined_call_operand.hbm [shape: f32[1,1], index: 2, kind: output, shape index: {}]
  %s3 = sld [smem:[#allocation0]]
  $region26: #{uncertainty_triplet_loss.1} parent=0
    _
  %s5 = ssub.s32 1, %s3
  %s6 = scalar_select 0, %s5, %s3
  $region1: #{uncertainty_triplet_loss.1} parent=0
    #allocation3 [shape = 'u8[512]{0}', space=smem, size = 0x200, scoped, tag = 'output window, operand 0, single buffered']
    #allocation4 [shape = 's32[1]{0}', space=sflag, size = 0x4, scoped, tag = 'scoped memory for uncertainty_triplet_loss.1']
    %7 = vsyncpa [#allocation4], 0
    // Predicated region
    $region2: #{uncertainty_triplet_loss.1} parent=1 // pred_check
      _
    $region3: #{uncertainty_triplet_loss.1} parent=1 // pred_check_branch
      %9 = sbr.rel (0) target = $region5
    $region4: #{uncertainty_triplet_loss.1} parent=1 // pred_region
      %s10 = sadd.s32 0, 0
      %p11 = scmp.lt.s32.totalorder %s10, 0
      %s12 = scalar_select %p11, %s10, 0
      %s13 = smul.addr %s12, 2
      %s14 = smul.addr %s13, 8
      %s15 = scalar_lea.vmem %s0, %s14
      %s16 = sadd.s32 0, 0
    $region5: #{uncertainty_triplet_loss.1} parent=1 // pred_fallthru
      _
    // Predicated region
    $region6: #{uncertainty_triplet_loss.1} parent=1 // pred_check
      _
    $region7: #{uncertainty_triplet_loss.1} parent=1 // pred_check_branch
      %18 = sbr.rel (0) target = $region9
    $region8: #{uncertainty_triplet_loss.1} parent=1 // pred_region
      %s19 = sadd.s32 0, 0
      %p20 = scmp.lt.s32.totalorder %s19, 0
      %s21 = scalar_select %p20, %s19, 0
      %s22 = smul.addr %s21, 2
      %s23 = smul.addr %s22, 8
      %s24 = scalar_lea.vmem %s1, %s23
      %s25 = sadd.s32 0, 0
    $region9: #{uncertainty_triplet_loss.1} parent=1 // pred_fallthru
      _
    %s26 = sadd.s32 0, 0
    %p27 = scmp.lt.s32.totalorder %s26, 0
    %s28 = scalar_select %p27, %s26, 0
    %s29 = smul.addr %s28, 2
    %s30 = smul.addr %s29, 8
    %s31 = scalar_lea.vmem %s0, %s30
    %s32 = sadd.s32 0, 0
    %p33 = scmp.lt.s32.totalorder %s32, 0
    %s34 = scalar_select %p33, %s32, 0
    %s35 = smul.addr %s34, 2
    %s36 = smul.addr %s35, 8
    %s37 = scalar_lea.vmem %s1, %s36
    %s38 = sadd.s32 0, 0
    %p39 = scmp.lt.s32.totalorder %s38, 0
    %s40 = scalar_select %p39, %s38, 0
    %s41 = smul.addr %s40, 2
    %s42 = smul.addr %s41, 8
    %s43 = scalar_lea.vmem %s0, %s42
    %s44 = sadd.s32 0, 0
    %s45 = sadd.s32 0, 0
    %p46 = scmp.lt.s32.totalorder %s45, 0
    %s47 = scalar_select %p46, %s45, 0
    %s48 = smul.addr %s47, 2
    %s49 = smul.addr %s48, 8
    %s50 = scalar_lea.vmem %s1, %s49
    %s51 = sadd.s32 0, 0
    %p52 = scmp.eq.s32.totalorder 0, 0
    // Predicated region
    $region10: #{uncertainty_triplet_loss.1} parent=1 // pred_check
      %p53 = pneg %p52
    $region11: #{uncertainty_triplet_loss.1} parent=1 // pred_check_branch
      %55 = sbr.rel (%p53) target = $region13
    $region12: #{uncertainty_triplet_loss.1} parent=1 // pred_region
      %56 = vst [vmem:[#allocation2] sm:$0xff] 0.0
      %57 = vst [vmem:[#allocation2 + $0x8] sm:$0xff] 0.0
    $region13: #{uncertainty_triplet_loss.1} parent=1 // pred_fallthru
      _
    %v58 = vld [vmem:[%s43] sm:$0xff]
    %v59 = vld [vmem:[%s43 + $0x8] sm:$0xff]
    %v60 = vld [vmem:[%s50] sm:$0xff]
    %v61 = vld [vmem:[%s50 + $0x8] sm:$0xff]
    %v62 = vlog2.pop %v60
    %v63 = vmul.f32 %v62, 0.6931472
    %v64 = vlog2.pop %v61
    %v65 = vmul.f32 %v64, 0.6931472
    %v66 = vmax.f32 %v63, -100.0
    %v67 = vmax.f32 %v65, -100.0
    %v68 = vsub.f32 1.0, %v60
    %v69 = vsub.f32 1.0, %v61
    %v70 = vlog2.pop %v68
    %v71 = vmul.f32 %v70, 0.6931472
    %v72 = vlog2.pop %v69
    %v73 = vmul.f32 %v72, 0.6931472
    %v74 = vmax.f32 %v71, -100.0
    %v75 = vmax.f32 %v73, -100.0
    %v76 = vmul.f32 %v58, %v66
    %v77 = vmul.f32 %v59, %v67
    %v78 = vsub.f32 1.0, %v58
    %v79 = vsub.f32 1.0, %v59
    %v80 = vmul.f32 %v78, %v74
    %v81 = vmul.f32 %v79, %v75
    %v82 = vadd.f32 %v76, %v80
    %v83 = vadd.f32 %v77, %v81
    %v84 = vld [vmem:[#allocation2] sm:$0xff]
    %v85 = vld [vmem:[#allocation2 + $0x8] sm:$0xff]
    %v86 = vadd.f32 %v84, %v82
    %v87 = vadd.f32 %v85, %v83
    %88 = vst [vmem:[#allocation2] sm:$0xff] %v86
    %89 = vst [vmem:[#allocation2 + $0x8] sm:$0xff] %v87
    // Predicated region
    $region14: #{uncertainty_triplet_loss.1} parent=1 // pred_check
      %p90 = pneg %p52
    $region15: #{uncertainty_triplet_loss.1} parent=1 // pred_check_branch
      %92 = sbr.rel (%p90) target = $region17
    $region16: #{uncertainty_triplet_loss.1} parent=1 // pred_region
      %v93 = vld [vmem:[#allocation2] sm:$0xff]
      %v94 = vld [vmem:[#allocation2 + $0x8] sm:$0xff]
      %v95 = vadd.f32 %v93, %v94
      %96 = vadd.xlane.f32.xlu0 %v95
      %v97 = vpop.xlane.xlu0 %96
      %v98 = vrot.slane %v97, 4
      %v99 = vadd.f32 %v97, %v98
      %v100 = vrot.slane %v99, 2
      %v101 = vadd.f32 %v99, %v100
      %v102 = vrot.slane %v101, 1
      %v103 = vadd.f32 %v101, %v102
      %s104 = vtos %v103
      %s105 = ssub.f32 0.0, %s104
      %s106 = scalar_lea.smem [#allocation3], 0
      %107 = sst [smem:[%s106]] %s105
    $region17: #{uncertainty_triplet_loss.1} parent=1 // pred_fallthru
      _
    // Predicated region
    $region18: #{uncertainty_triplet_loss.1} parent=1 // pred_check
      _
    $region19: #{uncertainty_triplet_loss.1} parent=1 // pred_check_branch
      %109 = sbr.rel (0) target = $region21
    $region20: #{uncertainty_triplet_loss.1} parent=1 // pred_region
      %s111 = ssub.s32 16, 16
      %112 = vsyncadd [#allocation4], %s111
      %115 = dma.smem_to_hbm [#allocation3], 16, %s2, [#allocation4]
    $region21: #{uncertainty_triplet_loss.1} parent=1 // pred_fallthru
      _
    // Predicated region
    $region22: #{uncertainty_triplet_loss.1} parent=1 // pred_check
      _
    $region23: #{uncertainty_triplet_loss.1} parent=1 // pred_check_branch
      %117 = sbr.rel (0) target = $region25
    $region24: #{uncertainty_triplet_loss.1} parent=1 // pred_region
      %118 = dma.done [#allocation4], 16
    $region25: #{uncertainty_triplet_loss.1} parent=1 // pred_fallthru
      _
    %119 = sfence
    %120 = vsyncpa [#allocation4], 1

</llo_original>
